<compile_context>
chip_gen: v6e
topology: v6e:2x2x1
jax: 0.10.0
libtpu: 0.0.40
codegen_flags: <defaults>
</compile_context>

<pallas_src>
import functools

import jax
import jax.numpy as jnp
import numpy as np
from jax.experimental import pallas as pl
from jax.experimental.pallas import tpu as pltpu

EPS = 1e-6
NUM_GROUPS = 32
COMPUTE_DTYPE = jnp.bfloat16            # MXU operand dtype (accumulation stays f32)


# --------------------------------------------------------------------------- #
# helpers
# --------------------------------------------------------------------------- #
def _vmem_limit_bytes():
    """Per-generation VMEM limit: ~3/4 of capacity, capped at 112 MiB.
    128-MiB parts (v5e/v6e) -> 96 MiB; 64-MiB parts (v7x) -> 48 MiB."""
    cap = 64 * 1024 * 1024
    try:
        cap = int(pltpu.get_tpu_info().vmem_capacity_bytes)
    except Exception:
        pass
    cap = max(cap, 32 * 1024 * 1024)
    return min(cap * 3 // 4, 112 * 1024 * 1024)


def _pick_tile(n, max_elems, align):
    """Largest multiple of `align` dividing n that is <= max_elems.
    Falls back to n itself (full extent is always a legal block) when n <= max_elems.
    Returns None if nothing fits."""
    max_elems = int(max_elems)
    best = None
    lim = min(n, max_elems)
    t = align
    while t <= lim:
        if n % t == 0:
            best = t
        t += align
    if best is None and n <= max_elems:
        best = n
    return best


def _const_spec(arr):
    return pl.BlockSpec(arr.shape, lambda *_: (0,) * arr.ndim)


# --------------------------------------------------------------------------- #
# Kernel 1: GroupNorm statistics, tiled over HW (reduction axis).
# Emits per-channel scale/shift such that h = x * scale + shift == GroupNorm(x).
# --------------------------------------------------------------------------- #
def _gn_stats_kernel(x_ref, gamma_ref, beta_ref, gmat_ref, gmat_t_ref,
                     scale_ref, shift_ref, sum_scr, sq_scr, *, n_per_group):
    t = pl.program_id(1)

    @pl.when(t == 0)
    def _():
        sum_scr[...] = jnp.zeros_like(sum_scr)
        sq_scr[...] = jnp.zeros_like(sq_scr)

    x = x_ref[0]                                                  # (t1, C) f32
    sum_scr[...] += jnp.sum(x, axis=0, keepdims=True)
    sq_scr[...] += jnp.sum(x * x, axis=0, keepdims=True)

    @pl.when(t == pl.num_programs(1) - 1)
    def _():
        gmat = gmat_ref[...]                                      # (C, G)
        gmat_t = gmat_t_ref[...]                                  # (G, C)
        mean_g = jnp.dot(sum_scr[...], gmat,
                         preferred_element_type=jnp.float32) / n_per_group
        mean_c = jnp.dot(mean_g, gmat_t, preferred_element_type=jnp.float32)
        ex2_g = jnp.dot(sq_scr[...], gmat,
                        preferred_element_type=jnp.float32) / n_per_group
        ex2_c = jnp.dot(ex2_g, gmat_t, preferred_element_type=jnp.float32)
        var_c = jnp.maximum(ex2_c - mean_c * mean_c, 0.0)
        inv_std = jax.lax.rsqrt(var_c + EPS)
        scale = inv_std * gamma_ref[...]
        scale_ref[0] = scale
        shift_ref[0] = beta_ref[...] - mean_c * scale


# --------------------------------------------------------------------------- #
# Kernel 2: normalize + fused Q/K/V projection (one (C, 3C) matmul per tile).
# --------------------------------------------------------------------------- #
def _norm_qkv_kernel(x_ref, scale_ref, shift_ref, wqkv_ref, bqkv_ref,
                     q_ref, k_ref, v_ref, *, c):
    h = (x_ref[0] * scale_ref[0] + shift_ref[0]).astype(COMPUTE_DTYPE)   # (t2, C)
    qkv = (jnp.dot(h, wqkv_ref[...], preferred_element_type=jnp.float32)
           + bqkv_ref[...]).astype(COMPUTE_DTYPE)                        # (t2, 3C)
    q_ref[0] = qkv[:, :c]
    k_ref[0] = qkv[:, c:2 * c]
    v_ref[0] = qkv[:, 2 * c:]


# --------------------------------------------------------------------------- #
# Kernel 3a: K/V-resident attention + projection + residual (channel-first out).
# --------------------------------------------------------------------------- #
def _attn_resident_kernel(xr_ref, q_ref, k_ref, v_ref, wp_ref, bp_ref, o_ref):
    q = q_ref[0]                                                  # (tq, C) bf16
    k = k_ref[0]                                                  # (HW, C) bf16
    s = jax.lax.dot_general(q, k, (((1,), (1,)), ((), ())),
                            preferred_element_type=jnp.float32)   # (tq, HW)
    m = jnp.max(s, axis=-1, keepdims=True)
    p = jnp.exp(s - m)
    l = jnp.sum(p, axis=-1, keepdims=True)
    attn = jnp.dot(p.astype(v_ref.dtype), v_ref[0],
                   preferred_element_type=jnp.float32)            # (tq, C)
    attn = (attn * pl.reciprocal(l, approx=True)).astype(COMPUTE_DTYPE)
    proj = jnp.dot(attn, wp_ref[...],
                   preferred_element_type=jnp.float32) + bp_ref[...]
    o_ref[0] = xr_ref[0] + proj.T                                 # (C, tq)


# --------------------------------------------------------------------------- #
# Kernel 3b: streamed flash attention (online softmax) + projection + residual.
# --------------------------------------------------------------------------- #
def _flash_attn_kernel(xr_ref, q_ref, k_ref, v_ref, wp_ref, bp_ref, o_ref,
                       m_scr, l_scr, acc_scr):
    kv = pl.program_id(2)

    @pl.when(kv == 0)
    def _():
        m_scr[...] = jnp.full_like(m_scr, -jnp.inf)
        l_scr[...] = jnp.zeros_like(l_scr)
        acc_scr[...] = jnp.zeros_like(acc_scr)

    q = q_ref[0]                                                  # (tq, C) bf16
    k = k_ref[0]                                                  # (tk, C) bf16
    s = jax.lax.dot_general(q, k, (((1,), (1,)), ((), ())),
                            preferred_element_type=jnp.float32)   # (tq, tk)
    m_prev = m_scr[...]
    m_new = jnp.maximum(m_prev, jnp.max(s, axis=-1, keepdims=True))
    alpha = jnp.exp(m_prev - m_new)
    p = jnp.exp(s - m_new)
    l_scr[...] = alpha * l_scr[...] + jnp.sum(p, axis=-1, keepdims=True)
    acc_scr[...] = alpha * acc_scr[...] + jnp.dot(
        p.astype(v_ref.dtype), v_ref[0], preferred_element_type=jnp.float32)
    m_scr[...] = m_new

    @pl.when(kv == pl.num_programs(2) - 1)
    def _():
        attn = (acc_scr[...] * pl.reciprocal(l_scr[...], approx=True)
                ).astype(COMPUTE_DTYPE)                           # (tq, C)
        proj = jnp.dot(attn, wp_ref[...],
                       preferred_element_type=jnp.float32) + bp_ref[...]
        o_ref[0] = xr_ref[0] + proj.T                             # (C, tq)


# --------------------------------------------------------------------------- #
# Wrapper
# --------------------------------------------------------------------------- #
def spatial_self_attention(x_nchw, params, *, force_stream=False,
                           max_tq=None, max_tk=None):
    """x_nchw: (B, C, H, W) float32. Returns (B, C, H, W) float32."""
    B, C, H, W = x_nchw.shape
    HW = H * W
    G = NUM_GROUPS
    assert C % G == 0, f"GroupNorm(32) requires C % 32 == 0, got C={C}"

    vmem_limit = _vmem_limit_bytes()
    budget = int(vmem_limit * 0.7)          # headroom for compiler scratch / pipelining

    def cparams(dims):
        return pltpu.CompilerParams(dimension_semantics=dims,
                                    vmem_limit_bytes=vmem_limit)

    x_chw = x_nchw.reshape(B, C, HW).astype(jnp.float32)          # NCHW view (no copy)
    # TODO(synk): the (B, HW, C) input transpose is the one remaining host-side layout
    # pass; the output transpose is folded into pass 3 (channel-first stores).
    x_bsc = jnp.transpose(x_chw, (0, 2, 1))

    # one-hot group membership (C, G) and its transpose, built once on the host
    cg = C // G
    gmat = (jnp.arange(C)[:, None] // cg == jnp.arange(G)[None, :]).astype(jnp.float32)
    gmat_t = gmat.T
    gamma = params["gamma"].reshape(1, C).astype(jnp.float32)
    beta = params["beta"].reshape(1, C).astype(jnp.float32)

    # fused QKV weights (Cin, 3*Cout) with 1/sqrt(C) folded into the Q slice
    attn_scale = float(C) ** (-0.5)
    w_qkv = jnp.concatenate(
        [params["wq"].T * attn_scale, params["wk"].T, params["wv"].T],
        axis=1).astype(COMPUTE_DTYPE)                             # (C, 3C)
    b_qkv = jnp.concatenate(
        [params["bq"] * attn_scale, params["bk"], params["bv"]]
    ).reshape(1, 3 * C).astype(jnp.float32)
    wp_t = params["wp"].T.astype(COMPUTE_DTYPE)                   # (C, C)
    bp = params["bp"].reshape(1, C).astype(jnp.float32)

    # ---- pass 1: GroupNorm stats (tiled over HW, reduction axis last) ------ #
    t1 = _pick_tile(HW, min(2048, max(8, budget // (32 * C))), 8) or HW
    scale_c, shift_c = pl.pallas_call(
        functools.partial(_gn_stats_kernel, n_per_group=float(HW * (C // G))),
        out_shape=(jax.ShapeDtypeStruct((B, 1, C), jnp.float32),) * 2,
        grid=(B, HW // t1),
        in_specs=[
            pl.BlockSpec((1, t1, C), lambda b, t: (b, t, 0)),
            _const_spec(gamma), _const_spec(beta),
            _const_spec(gmat), _const_spec(gmat_t),
        ],
        out_specs=(pl.BlockSpec((1, 1, C), lambda b, t: (b, 0, 0)),) * 2,
        scratch_shapes=[pltpu.VMEM((1, C), jnp.float32),
                        pltpu.VMEM((1, C), jnp.float32)],
        compiler_params=cparams(("parallel", "arbitrary")),
    )(x_bsc, gamma, beta, gmat, gmat_t)

    # ---- pass 2: normalize + fused Q/K/V projection ------------------------ #
    w2_bytes = 2 * (3 * C * C * 2 + 3 * C * 4)
    t2_cap = max(16, (budget // 2 - w2_bytes) // (20 * C))
    t2 = _pick_tile(HW, min(2048, t2_cap), 16) or HW
    q, k, v = pl.pallas_call(
        functools.partial(_norm_qkv_kernel, c=C),
        out_shape=(jax.ShapeDtypeStruct((B, HW, C), COMPUTE_DTYPE),) * 3,
        grid=(B, HW // t2),
        in_specs=[
            pl.BlockSpec((1, t2, C), lambda b, i: (b, i, 0)),
            pl.BlockSpec((1, 1, C), lambda b, i: (b, 0, 0)),
            pl.BlockSpec((1, 1, C), lambda b, i: (b, 0, 0)),
            _const_spec(w_qkv), _const_spec(b_qkv),
        ],
        out_specs=(pl.BlockSpec((1, t2, C), lambda b, i: (b, i, 0)),) * 3,
        compiler_params=cparams(("parallel", "parallel")),
    )(x_bsc, scale_c, shift_c, w_qkv, b_qkv)

    # ---- pass 3: attention + output projection + residual ------------------ #
    wp_bytes = 2 * (C * C * 2 + C * 4)
    kv_resident_bytes = 8 * HW * C                    # K+V bf16, double-buffered
    per_tq_resident = 20 * C + 12 * HW                # q/x/out blocks + score temps
    avail_res = budget - kv_resident_bytes - wp_bytes

    tq_res = None
    if (not force_stream) and avail_res > 0:
        tq_res = _pick_tile(HW, min(1024, avail_res // per_tq_resident), 128)

    if tq_res is not None:
        # K/V for one batch element stay VMEM-resident (index constant over q tiles).
        tq = tq_res
        out_chw = pl.pallas_call(
            _attn_resident_kernel,
            out_shape=jax.ShapeDtypeStruct((B, C, HW), jnp.float32),
            grid=(B, HW // tq),
            in_specs=[
                pl.BlockSpec((1, C, tq), lambda b, i: (b, 0, i)),   # residual (NCHW)
                pl.BlockSpec((1, tq, C), lambda b, i: (b, i, 0)),   # Q tile
                pl.BlockSpec((1, HW, C), lambda b, i: (b, 0, 0)),   # K resident / batch
                pl.BlockSpec((1, HW, C), lambda b, i: (b, 0, 0)),   # V resident / batch
                _const_spec(wp_t), _const_spec(bp),
            ],
            out_specs=pl.BlockSpec((1, C, tq), lambda b, i: (b, 0, i)),
            compiler_params=cparams(("parallel", "parallel")),
        )(x_chw, q, k, v, wp_t, bp)
    else:
        # Streamed flash path: grow tq aggressively, keep the score tile <= ~1 MiB.
        per_tq_stream = 24 * C
        tq_cap = max(128, (budget // 3) // per_tq_stream)
        tq_lim = min(1024, tq_cap)
        if max_tq is not None:
            tq_lim = min(tq_lim, max_tq)
        tq = _pick_tile(HW, tq_lim, 128) or HW
        tk_cap = max(16, min(512, (1 << 20) // (4 * tq), (budget // 4) // (8 * C)))
        if max_tk is not None:
            tk_cap = min(tk_cap, max_tk)
        tk = (_pick_tile(HW, tk_cap, 16) or _pick_tile(HW, tk_cap, 8) or HW)

        out_chw = pl.pallas_call(
            _flash_attn_kernel,
            out_shape=jax.ShapeDtypeStruct((B, C, HW), jnp.float32),
            grid=(B, HW // tq, HW // tk),
            in_specs=[
                pl.BlockSpec((1, C, tq), lambda b, i, j: (b, 0, i)),  # residual
                pl.BlockSpec((1, tq, C), lambda b, i, j: (b, i, 0)),  # Q tile
                pl.BlockSpec((1, tk, C), lambda b, i, j: (b, j, 0)),  # K tile (streamed)
                pl.BlockSpec((1, tk, C), lambda b, i, j: (b, j, 0)),  # V tile (streamed)
                _const_spec(wp_t), _const_spec(bp),
            ],
            out_specs=pl.BlockSpec((1, C, tq), lambda b, i, j: (b, 0, i)),
            scratch_shapes=[pltpu.VMEM((tq, 1), jnp.float32),   # running row max
                            pltpu.VMEM((tq, 1), jnp.float32),   # running row sum
                            pltpu.VMEM((tq, C), jnp.float32)],  # f32 accumulator
            compiler_params=cparams(("parallel", "parallel", "arbitrary")),
        )(x_chw, q, k, v, wp_t, bp)

    return out_chw.reshape(B, C, H, W)


# --------------------------------------------------------------------------- #
# Pure-JAX reference mirroring the PyTorch module (NCHW, f32)
# --------------------------------------------------------------------------- #
def reference_forward(x, params):
    B, C, H, W = x.shape
    G = NUM_GROUPS
    xr = x.reshape(B, G, C // G, H, W)
    mean = xr.mean(axis=(2, 3, 4), keepdims=True)
    var = xr.var(axis=(2, 3, 4), keepdims=True)
    h = ((xr - mean) / jnp.sqrt(var + EPS)).reshape(B, C, H, W)
    h = h * params["gamma"].reshape(1, C, 1, 1) + params["beta"].reshape(1, C, 1, 1)

    def conv1x1(t, w, b):  # w: (Cout, Cin)
        return jnp.einsum("oc,bchw->bohw", w, t) + b.reshape(1, -1, 1, 1)

    q = conv1x1(h, params["wq"], params["bq"])
    k = conv1x1(h, params["wk"], params["bk"])
    v = conv1x1(h, params["wv"], params["bv"])
    q = q.reshape(B, C, H * W).transpose(0, 2, 1)          # b (hw) c
    k = k.reshape(B, C, H * W)                             # b c (hw)
    w_ = jnp.einsum("bij,bjk->bik", q, k) * (int(C) ** (-0.5))
    w_ = jax.nn.softmax(w_, axis=2)
    v = v.reshape(B, C, H * W)
    h_ = jnp.einsum("bij,bjk->bik", v, w_.transpose(0, 2, 1))
    h_ = h_.reshape(B, C, H, W)
    h_ = conv1x1(h_, params["wp"], params["bp"])
    return x + h_


def make_params(key, C):
    ks = jax.random.split(key, 10)
    scale = 0.1
    return {
        "gamma": jnp.ones((C,), jnp.float32) + 0.05 * jax.random.normal(ks[0], (C,)),
        "beta": 0.05 * jax.random.normal(ks[1], (C,)),
        "wq": scale * jax.random.normal(ks[2], (C, C), jnp.float32),
        "bq": scale * jax.random.normal(ks[3], (C,), jnp.float32),
        "wk": scale * jax.random.normal(ks[4], (C, C), jnp.float32),
        "bk": scale * jax.random.normal(ks[5], (C,), jnp.float32),
        "wv": scale * jax.random.normal(ks[6], (C, C), jnp.float32),
        "bv": scale * jax.random.normal(ks[7], (C,), jnp.float32),
        "wp": scale * jax.random.normal(ks[8], (C, C), jnp.float32),
        "bp": scale * jax.random.normal(ks[9], (C,), jnp.float32),
    }


if __name__ == "__main__":
    key = jax.random.PRNGKey(0)
    kx, kp = jax.random.split(key)

    # GroupNorm(32) requires C % 32 == 0; C=128 keeps all blocks lane-dense.
    # HW = 16*16 = 256 -> K/V-resident path on the default call.
    B, C, H, W = 2, 128, 16, 16
    x = jax.random.normal(kx, (B, C, H, W), jnp.float32)
    params = make_params(kp, C)

    ref = jax.block_until_ready(reference_forward(x, params))

    # default path (K/V resident in VMEM at these shapes)
    out = jax.block_until_ready(spatial_self_attention(x, params))
    np.testing.assert_allclose(np.asarray(out), np.asarray(ref), rtol=3e-2, atol=3e-2)

    # also exercise the streamed flash path used when K/V exceed the VMEM budget
    out_s = jax.block_until_ready(
        spatial_self_attention(x, params, force_stream=True, max_tq=128, max_tk=128))
    np.testing.assert_allclose(np.asarray(out_s), np.asarray(ref), rtol=3e-2, atol=3e-2)

    print("KERNEL_OK")
</pallas_src>

<mosaic_0001>
module attributes {stable_mosaic.version = 11 : i64} {
  func.func @_gn_stats_kernel(%arg0: i32, %arg1: i32, %arg2: memref<1x256x128xf32, #tpu.memory_space<vmem>>, %arg3: memref<1x128xf32, #tpu.memory_space<vmem>>, %arg4: memref<1x128xf32, #tpu.memory_space<vmem>>, %arg5: memref<128x32xf32, #tpu.memory_space<vmem>>, %arg6: memref<32x128xf32, #tpu.memory_space<vmem>>, %arg7: memref<1x1x128xf32, #tpu.memory_space<vmem>>, %arg8: memref<1x1x128xf32, #tpu.memory_space<vmem>>, %arg9: memref<1x128xf32, #tpu.memory_space<vmem>>, %arg10: memref<1x128xf32, #tpu.memory_space<vmem>>) attributes {dimension_semantics = [#tpu.dimension_semantics<parallel>, #tpu.dimension_semantics<arbitrary>], iteration_bounds = array<i64: 2, 1>, scalar_prefetch = 0 : i64, scratch_operands = 2 : i64, tpu.core_type = #tpu.core_type<tc>, window_params = [{transform_indices = @transform_0, window_bounds = array<i64: 1, 256, 128>}, {pipeline_mode = #tpu.pipeline_mode<synchronous>, transform_indices = @transform_1, window_bounds = array<i64: 1, 128>}, {pipeline_mode = #tpu.pipeline_mode<synchronous>, transform_indices = @transform_2, window_bounds = array<i64: 1, 128>}, {pipeline_mode = #tpu.pipeline_mode<synchronous>, transform_indices = @transform_3, window_bounds = array<i64: 128, 32>}, {pipeline_mode = #tpu.pipeline_mode<synchronous>, transform_indices = @transform_4, window_bounds = array<i64: 32, 128>}, {transform_indices = @transform_5, window_bounds = array<i64: 1, 1, 128>}, {transform_indices = @transform_6, window_bounds = array<i64: 1, 1, 128>}]} {
    %c0_i32 = arith.constant 0 : i32
    %0 = arith.cmpi eq, %arg1, %c0_i32 : i32
    %1 = arith.extui %0 : i1 to i32
    %c0_i32_0 = arith.constant 0 : i32
    %2 = arith.cmpi ne, %1, %c0_i32_0 : i32
    scf.if %2 {
      %cst_14 = arith.constant 0.000000e+00 : f32
      %19 = vector.broadcast %cst_14 : f32 to vector<1x128xf32>
      %c0_15 = arith.constant 0 : index
      %c0_16 = arith.constant 0 : index
      %20 = vector.load %arg9[%c0_15, %c0_16] : memref<1x128xf32, #tpu.memory_space<vmem>>, vector<1x128xf32>
      tpu.vector_store %arg9[%c0_15, %c0_16], %19 {strides = array<i32>} : memref<1x128xf32, #tpu.memory_space<vmem>>, vector<1x128xf32>,
      %cst_17 = arith.constant 0.000000e+00 : f32
      %21 = vector.broadcast %cst_17 : f32 to vector<1x128xf32>
      %c0_18 = arith.constant 0 : index
      %c0_19 = arith.constant 0 : index
      %22 = vector.load %arg10[%c0_18, %c0_19] : memref<1x128xf32, #tpu.memory_space<vmem>>, vector<1x128xf32>
      tpu.vector_store %arg10[%c0_18, %c0_19], %21 {strides = array<i32>} : memref<1x128xf32, #tpu.memory_space<vmem>>, vector<1x128xf32>,
    } else {
    }
    %c0 = arith.constant 0 : index
    %c0_1 = arith.constant 0 : index
    %c0_2 = arith.constant 0 : index
    %3 = vector.load %arg2[%c0, %c0_1, %c0_2] : memref<1x256x128xf32, #tpu.memory_space<vmem>>, vector<1x256x128xf32>
    %4 = vector.shape_cast %3 : vector<1x256x128xf32> to vector<256x128xf32>
    %c0_3 = arith.constant 0 : index
    %c0_4 = arith.constant 0 : index
    %5 = vector.load %arg9[%c0_3, %c0_4] : memref<1x128xf32, #tpu.memory_space<vmem>>, vector<1x128xf32>
    %cst = arith.constant dense<0.000000e+00> : vector<128xf32>
    %6 = vector.multi_reduction <add>, %4, %cst [0] : vector<256x128xf32> to vector<128xf32>
    %7 = vector.shape_cast %6 : vector<128xf32> to vector<1x128xf32>
    %8 = arith.addf %5, %7 : vector<1x128xf32>
    %c0_5 = arith.constant 0 : index
    %c0_6 = arith.constant 0 : index
    %9 = vector.load %arg9[%c0_5, %c0_6] : memref<1x128xf32, #tpu.memory_space<vmem>>, vector<1x128xf32>
    tpu.vector_store %arg9[%c0_5, %c0_6], %8 {strides = array<i32>} : memref<1x128xf32, #tpu.memory_space<vmem>>, vector<1x128xf32>,
    %c0_7 = arith.constant 0 : index
    %c0_8 = arith.constant 0 : index
    %10 = vector.load %arg10[%c0_7, %c0_8] : memref<1x128xf32, #tpu.memory_space<vmem>>, vector<1x128xf32>
    %11 = arith.mulf %4, %4 : vector<256x128xf32>
    %cst_9 = arith.constant dense<0.000000e+00> : vector<128xf32>
    %12 = vector.multi_reduction <add>, %11, %cst_9 [0] : vector<256x128xf32> to vector<128xf32>
    %13 = vector.shape_cast %12 : vector<128xf32> to vector<1x128xf32>
    %14 = arith.addf %10, %13 : vector<1x128xf32>
    %c0_10 = arith.constant 0 : index
    %c0_11 = arith.constant 0 : index
    %15 = vector.load %arg10[%c0_10, %c0_11] : memref<1x128xf32, #tpu.memory_space<vmem>>, vector<1x128xf32>
    tpu.vector_store %arg10[%c0_10, %c0_11], %14 {strides = array<i32>} : memref<1x128xf32, #tpu.memory_space<vmem>>, vector<1x128xf32>,
    %c0_i32_12 = arith.constant 0 : i32
    %16 = arith.cmpi eq, %arg1, %c0_i32_12 : i32
    %17 = arith.extui %16 : i1 to i32
    %c0_i32_13 = arith.constant 0 : i32
    %18 = arith.cmpi ne, %17, %c0_i32_13 : i32
    scf.if %18 {
      %c0_14 = arith.constant 0 : index
      %c0_15 = arith.constant 0 : index
      %19 = vector.load %arg5[%c0_14, %c0_15] : memref<128x32xf32, #tpu.memory_space<vmem>>, vector<128x32xf32>
      %c0_16 = arith.constant 0 : index
      %c0_17 = arith.constant 0 : index
      %20 = vector.load %arg6[%c0_16, %c0_17] : memref<32x128xf32, #tpu.memory_space<vmem>>, vector<32x128xf32>
      %c0_18 = arith.constant 0 : index
      %c0_19 = arith.constant 0 : index
      %21 = vector.load %arg9[%c0_18, %c0_19] : memref<1x128xf32, #tpu.memory_space<vmem>>, vector<1x128xf32>
      %cst_20 = arith.constant dense<0.000000e+00> : vector<1x32xf32>
      %22 = tpu.matmul %21, %19, %cst_20 {dimension_numbers = #tpu.dot_dimension_numbers<[1], [0], [0], [1], [0, 0, 1, 1], [], []>} : vector<1x128xf32>, vector<128x32xf32>, vector<1x32xf32> -> vector<1x32xf32>
      %cst_21 = arith.constant 1.024000e+03 : f32
      %23 = vector.broadcast %cst_21 : f32 to vector<1x32xf32>
      %24 = arith.divf %22, %23 : vector<1x32xf32>
      %cst_22 = arith.constant dense<0.000000e+00> : vector<1x128xf32>
      %25 = tpu.matmul %24, %20, %cst_22 {dimension_numbers = #tpu.dot_dimension_numbers<[1], [0], [0], [1], [0, 0, 1, 1], [], []>} : vector<1x32xf32>, vector<32x128xf32>, vector<1x128xf32> -> vector<1x128xf32>
      %c0_23 = arith.constant 0 : index
      %c0_24 = arith.constant 0 : index
      %26 = vector.load %arg10[%c0_23, %c0_24] : memref<1x128xf32, #tpu.memory_space<vmem>>, vector<1x128xf32>
      %cst_25 = arith.constant dense<0.000000e+00> : vector<1x32xf32>
      %27 = tpu.matmul %26, %19, %cst_25 {dimension_numbers = #tpu.dot_dimension_numbers<[1], [0], [0], [1], [0, 0, 1, 1], [], []>} : vector<1x128xf32>, vector<128x32xf32>, vector<1x32xf32> -> vector<1x32xf32>
      %cst_26 = arith.constant 1.024000e+03 : f32
      %28 = vector.broadcast %cst_26 : f32 to vector<1x32xf32>
      %29 = arith.divf %27, %28 : vector<1x32xf32>
      %cst_27 = arith.constant dense<0.000000e+00> : vector<1x128xf32>
      %30 = tpu.matmul %29, %20, %cst_27 {dimension_numbers = #tpu.dot_dimension_numbers<[1], [0], [0], [1], [0, 0, 1, 1], [], []>} : vector<1x32xf32>, vector<32x128xf32>, vector<1x128xf32> -> vector<1x128xf32>
      %31 = arith.mulf %25, %25 : vector<1x128xf32>
      %32 = arith.subf %30, %31 : vector<1x128xf32>
      %cst_28 = arith.constant 0.000000e+00 : f32
      %33 = vector.broadcast %cst_28 : f32 to vector<1x128xf32>
      %34 = arith.maximumf %32, %33 : vector<1x128xf32>
      %cst_29 = arith.constant 9.99999997E-7 : f32
      %35 = vector.broadcast %cst_29 : f32 to vector<1x128xf32>
      %36 = arith.addf %34, %35 : vector<1x128xf32>
      %37 = math.rsqrt %36 : vector<1x128xf32>
      %c0_30 = arith.constant 0 : index
      %c0_31 = arith.constant 0 : index
      %38 = vector.load %arg3[%c0_30, %c0_31] : memref<1x128xf32, #tpu.memory_space<vmem>>, vector<1x128xf32>
      %39 = arith.mulf %37, %38 : vector<1x128xf32>
      %c0_32 = arith.constant 0 : index
      %c0_33 = arith.constant 0 : index
      %c0_34 = arith.constant 0 : index
      %40 = vector.load %arg7[%c0_32, %c0_33, %c0_34] : memref<1x1x128xf32, #tpu.memory_space<vmem>>, vector<1x1x128xf32>
      %41 = vector.shape_cast %40 : vector<1x1x128xf32> to vector<1x128xf32>
      %42 = vector.shape_cast %39 : vector<1x128xf32> to vector<1x1x128xf32>
      tpu.vector_store %arg7[%c0_32, %c0_33, %c0_34], %42 {strides = array<i32>} : memref<1x1x128xf32, #tpu.memory_space<vmem>>, vector<1x1x128xf32>,
      %c0_35 = arith.constant 0 : index
      %c0_36 = arith.constant 0 : index
      %43 = vector.load %arg4[%c0_35, %c0_36] : memref<1x128xf32, #tpu.memory_space<vmem>>, vector<1x128xf32>
      %44 = arith.mulf %25, %39 : vector<1x128xf32>
      %45 = arith.subf %43, %44 : vector<1x128xf32>
      %c0_37 = arith.constant 0 : index
      %c0_38 = arith.constant 0 : index
      %c0_39 = arith.constant 0 : index
      %46 = vector.load %arg8[%c0_37, %c0_38, %c0_39] : memref<1x1x128xf32, #tpu.memory_space<vmem>>, vector<1x1x128xf32>
      %47 = vector.shape_cast %46 : vector<1x1x128xf32> to vector<1x128xf32>
      %48 = vector.shape_cast %45 : vector<1x128xf32> to vector<1x1x128xf32>
      tpu.vector_store %arg8[%c0_37, %c0_38, %c0_39], %48 {strides = array<i32>} : memref<1x1x128xf32, #tpu.memory_space<vmem>>, vector<1x1x128xf32>,
    } else {
    }
    return
  }
  func.func @transform_0(%arg0: i32, %arg1: i32) -> (i32, i32, i32) {
    %c0_i32 = arith.constant 0 : i32
    %c0_i32_0 = arith.constant 0 : i32
    return %arg0, %arg1, %c0_i32 : i32, i32, i32
  }
  func.func @transform_1(%arg0: i32, %arg1: i32) -> (i32, i32) {
    %c0_i32 = arith.constant 0 : i32
    %c0_i32_0 = arith.constant 0 : i32
    %c0_i32_1 = arith.constant 0 : i32
    return %c0_i32, %c0_i32_0 : i32, i32
  }
  func.func @transform_2(%arg0: i32, %arg1: i32) -> (i32, i32) {
    %c0_i32 = arith.constant 0 : i32
    %c0_i32_0 = arith.constant 0 : i32
    %c0_i32_1 = arith.constant 0 : i32
    return %c0_i32, %c0_i32_0 : i32, i32
  }
  func.func @transform_3(%arg0: i32, %arg1: i32) -> (i32, i32) {
    %c0_i32 = arith.constant 0 : i32
    %c0_i32_0 = arith.constant 0 : i32
    %c0_i32_1 = arith.constant 0 : i32
    return %c0_i32, %c0_i32_0 : i32, i32
  }
  func.func @transform_4(%arg0: i32, %arg1: i32) -> (i32, i32) {
    %c0_i32 = arith.constant 0 : i32
    %c0_i32_0 = arith.constant 0 : i32
    %c0_i32_1 = arith.constant 0 : i32
    return %c0_i32, %c0_i32_0 : i32, i32
  }
  func.func @transform_5(%arg0: i32, %arg1: i32) -> (i32, i32, i32) {
    %c0_i32 = arith.constant 0 : i32
    %c0_i32_0 = arith.constant 0 : i32
    %c0_i32_1 = arith.constant 0 : i32
    return %arg0, %c0_i32, %c0_i32_0 : i32, i32, i32
  }
  func.func @transform_6(%arg0: i32, %arg1: i32) -> (i32, i32, i32) {
    %c0_i32 = arith.constant 0 : i32
    %c0_i32_0 = arith.constant 0 : i32
    %c0_i32_1 = arith.constant 0 : i32
    return %arg0, %c0_i32, %c0_i32_0 : i32, i32, i32
  }
}

</mosaic_0001>

<llo_original>
// kernel: tpu_custom_call.1
$region0: #{tpu_custom_call.1}
  #allocation0 [shape = 'u32[]', space=smem, size = 0x4, offset = 0x4, fixed_abs, tag = 'smem constant byte address 0x4 - core index']
  #allocation1 [shape = 'u32[144,128]{1,0:T(1,128)}', space=vmem, size = 0x12000, scoped, tag = 'internal scratch']
  #allocation2 [shape = 'f32[1,128]{1,0:T(1,128)}', space=vmem, size = 0x200, scoped, tag = 'scratch operand']
  #allocation3 [shape = 'f32[1,128]{1,0:T(1,128)}', space=vmem, size = 0x200, scoped, tag = 'scratch operand']
  %s0 = inlined_call_operand.hbm [shape: f32[2,256,128], index: 0, kind: input, shape index: {}]
  %s1 = inlined_call_operand.vmem [shape: f32[1,128], index: 1, kind: input, shape index: {}]
  %s2 = inlined_call_operand.vmem [shape: f32[1,128], index: 2, kind: input, shape index: {}]
  %s3 = inlined_call_operand.vmem [shape: f32[128,32], index: 3, kind: input, shape index: {}]
  %s4 = inlined_call_operand.vmem [shape: f32[32,128], index: 4, kind: input, shape index: {}]
  %s5 = inlined_call_operand.hbm [shape: f32[2,1,128], index: 5, kind: output, shape index: {0}]
  %s6 = inlined_call_operand.hbm [shape: f32[2,1,128], index: 6, kind: output, shape index: {1}]
  %7 = xla_tuple %s5, %s6
  %s8 = sld [smem:[#allocation0]]
  $region73: #{tpu_custom_call.1} parent=0
    _
  %s10 = ssub.s32 1, %s8
  %s11 = scalar_select 0, %s10, %s8
  $region1: #{tpu_custom_call.1} parent=0
    #allocation4 [shape = 'u8[262144]{0}', space=vmem, size = 0x40000, scoped, tag = 'input window, operand 0']
    #allocation5 [shape = 's32[2]{0}', space=sflag, size = 0x8, scoped, tag = 'scoped memory for tpu_custom_call.1']
    #allocation6 [shape = 's32[2]{0}', space=sflag, size = 0x8, scoped, tag = 'scoped memory for tpu_custom_call.1']
    #allocation7 [shape = 'u8[1024]{0}', space=vmem, size = 0x400, scoped, tag = 'output window, operand 0']
    #allocation8 [shape = 'u8[1024]{0}', space=vmem, size = 0x400, scoped, tag = 'output window, operand 1']
    #allocation9 [shape = 's32[2]{0}', space=sflag, size = 0x8, scoped, tag = 'scoped memory for tpu_custom_call.1']
    %12 = vsyncpa [#allocation5], 0
    %s13 = scalar_lea.sflag [#allocation5], 1
    %14 = vsyncpa %s13, 0
    %15 = vsyncpa [#allocation6], 0
    %s16 = scalar_lea.sflag [#allocation6], 1
    %17 = vsyncpa %s16, 0
    %18 = vsyncpa [#allocation9], 0
    %s19 = scalar_lea.sflag [#allocation9], 1
    %20 = vsyncpa %s19, 0
    loop: start=0, step=1, limit=4
    $region2: #{tpu_custom_call.1} parent=1 // loop_pre_header
      _
    $region3: #{tpu_custom_call.1} parent=1 // loop_header
      %s22 = sphi 0, %s26
      %p23 = scmp.ge.s32.totalorder %s22, 4
      %s29 = sphi 0, %s41
      %s30 = sphi 0, %s37
      %s31 = sphi 0, %s29
      %s32 = sphi 0, %s30
      %s33 = sphi 0, %s31
      %s34 = sphi 0, %s32
      %s46 = sphi 0, %s48
      %s49 = sphi 0, %s46
      %s50 = sphi 0, %s49
      %s66 = sphi 0, %s50
      %s70 = sphi 0, %s70
      %s72 = sphi 0, %s70
      %s73 = sphi 0, %s72
      %s87 = sphi 0, %s73
      %s91 = sphi 0, %s91
      %s93 = sphi 0, %s91
      %s94 = sphi 0, %s93
      %s108 = sphi 0, %s94
      %s112 = sphi 0, %s112
      %s114 = sphi 0, %s112
      %s115 = sphi 0, %s114
      %s129 = sphi 0, %s115
      %s133 = sphi 0, %s133
      %s135 = sphi 0, %s133
      %s136 = sphi 0, %s135
      %s150 = sphi 0, %s136
      %s156 = sphi 0, %s158
      %s159 = sphi 0, %s156
      %s160 = sphi 0, %s159
      %s176 = sphi 0, %s160
      %s182 = sphi 0, %s184
      %s185 = sphi 0, %s182
      %s186 = sphi 0, %s185
      %s202 = sphi 0, %s186
    $region4: #{tpu_custom_call.1} parent=1 // loop_header_branch
      %25 = sbr.rel (%p23) target = $region8
    $region5: #{tpu_custom_call.1} parent=1 // loop_body
      %s27 = ssub.s32 %s22, 1
      %s28 = ssub.s32 %s22, 2
      %s35 = sadd.s32 1, %s30
      %p36 = scmp.ge.s32.totalorder %s35, 1
      %s37 = scalar_select %p36, 0, %s35
      %s38 = sadd.s32 1, %s29
      %s39 = scalar_select %p36, %s38, %s29
      %p40 = scmp.ge.s32.totalorder %s39, 2
      %s41 = scalar_select %p40, 0, %s39
      %s42 = ssub.s32 %s29, %s41
      %s43 = ssub.s32 %s30, %s37
      %s44 = sor.u32 %s42, %s43
      %p45 = scmp.eq.s32.totalorder %s44, 0
      %s47 = sadd.s32 %s46, 1
      %s48 = scalar_select %p45, %s46, %s47
      %p51 = pneg %p45
      %p52 = scmp.eq.s32.totalorder %s22, 1
      %p53 = por %p51, %p52
      %p54 = scmp.ne.s32.totalorder %s46, %s49
      %p55 = scmp.eq.s32.totalorder %s22, 0
      %p56 = por %p54, %p55
      %p57 = scmp.ne.s32.totalorder %s46, %s49
      %p58 = scmp.eq.s32.totalorder %s27, 1
      %p59 = por %p57, %p58
      %p60 = scmp.ne.s32.totalorder %s49, %s50
      %p61 = scmp.eq.s32.totalorder %s27, 0
      %p62 = por %p60, %p61
      %p63 = scmp.ne.s32.totalorder %s49, %s50
      %p64 = scmp.eq.s32.totalorder %s28, 1
      %p65 = por %p63, %p64
      %p67 = scmp.ne.s32.totalorder %s50, %s66
      %p68 = scmp.eq.s32.totalorder %s28, 0
      %p69 = por %p67, %p68
      %s71 = sadd.s32 %s70, 1
      %p74 = scmp.eq.s32.totalorder %s22, 1
      %p75 = scmp.ne.s32.totalorder %s70, %s72
      %p76 = scmp.eq.s32.totalorder %s22, 0
      %p77 = por %p75, %p76
      %p78 = scmp.ne.s32.totalorder %s70, %s72
      %p79 = scmp.eq.s32.totalorder %s27, 1
      %p80 = por %p78, %p79
      %p81 = scmp.ne.s32.totalorder %s72, %s73
      %p82 = scmp.eq.s32.totalorder %s27, 0
      %p83 = por %p81, %p82
      %p84 = scmp.ne.s32.totalorder %s72, %s73
      %p85 = scmp.eq.s32.totalorder %s28, 1
      %p86 = por %p84, %p85
      %p88 = scmp.ne.s32.totalorder %s73, %s87
      %p89 = scmp.eq.s32.totalorder %s28, 0
      %p90 = por %p88, %p89
      %s92 = sadd.s32 %s91, 1
      %p95 = scmp.eq.s32.totalorder %s22, 1
      %p96 = scmp.ne.s32.totalorder %s91, %s93
      %p97 = scmp.eq.s32.totalorder %s22, 0
      %p98 = por %p96, %p97
      %p99 = scmp.ne.s32.totalorder %s91, %s93
      %p100 = scmp.eq.s32.totalorder %s27, 1
      %p101 = por %p99, %p100
      %p102 = scmp.ne.s32.totalorder %s93, %s94
      %p103 = scmp.eq.s32.totalorder %s27, 0
      %p104 = por %p102, %p103
      %p105 = scmp.ne.s32.totalorder %s93, %s94
      %p106 = scmp.eq.s32.totalorder %s28, 1
      %p107 = por %p105, %p106
      %p109 = scmp.ne.s32.totalorder %s94, %s108
      %p110 = scmp.eq.s32.totalorder %s28, 0
      %p111 = por %p109, %p110
      %s113 = sadd.s32 %s112, 1
      %p116 = scmp.eq.s32.totalorder %s22, 1
      %p117 = scmp.ne.s32.totalorder %s112, %s114
      %p118 = scmp.eq.s32.totalorder %s22, 0
      %p119 = por %p117, %p118
      %p120 = scmp.ne.s32.totalorder %s112, %s114
      %p121 = scmp.eq.s32.totalorder %s27, 1
      %p122 = por %p120, %p121
      %p123 = scmp.ne.s32.totalorder %s114, %s115
      %p124 = scmp.eq.s32.totalorder %s27, 0
      %p125 = por %p123, %p124
      %p126 = scmp.ne.s32.totalorder %s114, %s115
      %p127 = scmp.eq.s32.totalorder %s28, 1
      %p128 = por %p126, %p127
      %p130 = scmp.ne.s32.totalorder %s115, %s129
      %p131 = scmp.eq.s32.totalorder %s28, 0
      %p132 = por %p130, %p131
      %s134 = sadd.s32 %s133, 1
      %p137 = scmp.eq.s32.totalorder %s22, 1
      %p138 = scmp.ne.s32.totalorder %s133, %s135
      %p139 = scmp.eq.s32.totalorder %s22, 0
      %p140 = por %p138, %p139
      %p141 = scmp.ne.s32.totalorder %s133, %s135
      %p142 = scmp.eq.s32.totalorder %s27, 1
      %p143 = por %p141, %p142
      %p144 = scmp.ne.s32.totalorder %s135, %s136
      %p145 = scmp.eq.s32.totalorder %s27, 0
      %p146 = por %p144, %p145
      %p147 = scmp.ne.s32.totalorder %s135, %s136
      %p148 = scmp.eq.s32.totalorder %s28, 1
      %p149 = por %p147, %p148
      %p151 = scmp.ne.s32.totalorder %s136, %s150
      %p152 = scmp.eq.s32.totalorder %s28, 0
      %p153 = por %p151, %p152
      %s154 = ssub.s32 %s29, %s41
      %p155 = scmp.eq.s32.totalorder %s154, 0
      %s157 = sadd.s32 %s156, 1
      %s158 = scalar_select %p155, %s156, %s157
      %p161 = pneg %p155
      %p162 = scmp.eq.s32.totalorder %s22, 1
      %p163 = por %p161, %p162
      %p164 = scmp.ne.s32.totalorder %s156, %s159
      %p165 = scmp.eq.s32.totalorder %s22, 0
      %p166 = por %p164, %p165
      %p167 = scmp.ne.s32.totalorder %s156, %s159
      %p168 = scmp.eq.s32.totalorder %s27, 1
      %p169 = por %p167, %p168
      %p170 = scmp.ne.s32.totalorder %s159, %s160
      %p171 = scmp.eq.s32.totalorder %s27, 0
      %p172 = por %p170, %p171
      %p173 = scmp.ne.s32.totalorder %s159, %s160
      %p174 = scmp.eq.s32.totalorder %s28, 1
      %p175 = por %p173, %p174
      %p177 = scmp.ne.s32.totalorder %s160, %s176
      %p178 = scmp.eq.s32.totalorder %s28, 0
      %p179 = por %p177, %p178
      %s180 = ssub.s32 %s29, %s41
      %p181 = scmp.eq.s32.totalorder %s180, 0
      %s183 = sadd.s32 %s182, 1
      %s184 = scalar_select %p181, %s182, %s183
      %p187 = pneg %p181
      %p188 = scmp.eq.s32.totalorder %s22, 1
      %p189 = por %p187, %p188
      %p190 = scmp.ne.s32.totalorder %s182, %s185
      %p191 = scmp.eq.s32.totalorder %s22, 0
      %p192 = por %p190, %p191
      %p193 = scmp.ne.s32.totalorder %s182, %s185
      %p194 = scmp.eq.s32.totalorder %s27, 1
      %p195 = por %p193, %p194
      %p196 = scmp.ne.s32.totalorder %s185, %s186
      %p197 = scmp.eq.s32.totalorder %s27, 0
      %p198 = por %p196, %p197
      %p199 = scmp.ne.s32.totalorder %s185, %s186
      %p200 = scmp.eq.s32.totalorder %s28, 1
      %p201 = por %p199, %p200
      %p203 = scmp.ne.s32.totalorder %s186, %s202
      %p204 = scmp.eq.s32.totalorder %s28, 0
      %p205 = por %p203, %p204
      %p206 = scmp.le.s32.totalorder 1, %s22
      %p207 = scmp.lt.s32.totalorder %s22, 3
      %p208 = pnand %p206, %p207
      %p209 = pneg %p208
      // Predicated region
      $region9: #{tpu_custom_call.1} parent=5 // pred_check
        _
      $region10: #{tpu_custom_call.1} parent=5 // pred_check_branch
        %211 = sbr.rel (%p208) target = $region12
      $region11: #{tpu_custom_call.1} parent=5 // pred_region
        %s212 = ssub.s32 %s22, 1
        // Predicated region
        $region13: #{tpu_custom_call.1} parent=11 // pred_check
          %p213 = pneg %p83
        $region14: #{tpu_custom_call.1} parent=11 // pred_check_branch
          %215 = sbr.rel (%p213) target = $region16
        $region15: #{tpu_custom_call.1} parent=11 // pred_region
          _
        $region16: #{tpu_custom_call.1} parent=11 // pred_fallthru
          _
        // Predicated region
        $region17: #{tpu_custom_call.1} parent=11 // pred_check
          %p216 = pneg %p104
        $region18: #{tpu_custom_call.1} parent=11 // pred_check_branch
          %218 = sbr.rel (%p216) target = $region20
        $region19: #{tpu_custom_call.1} parent=11 // pred_region
          _
        $region20: #{tpu_custom_call.1} parent=11 // pred_fallthru
          _
        // Predicated region
        $region21: #{tpu_custom_call.1} parent=11 // pred_check
          %p219 = pneg %p125
        $region22: #{tpu_custom_call.1} parent=11 // pred_check_branch
          %221 = sbr.rel (%p219) target = $region24
        $region23: #{tpu_custom_call.1} parent=11 // pred_region
          _
        $region24: #{tpu_custom_call.1} parent=11 // pred_fallthru
          _
        // Predicated region
        $region25: #{tpu_custom_call.1} parent=11 // pred_check
          %p222 = pneg %p146
        $region26: #{tpu_custom_call.1} parent=11 // pred_check_branch
          %224 = sbr.rel (%p222) target = $region28
        $region27: #{tpu_custom_call.1} parent=11 // pred_region
          _
        $region28: #{tpu_custom_call.1} parent=11 // pred_fallthru
          _
      $region12: #{tpu_custom_call.1} parent=5 // pred_fallthru
        _
      %p225 = scmp.lt.s32.totalorder %s22, 2
      // Predicated region
      $region29: #{tpu_custom_call.1} parent=5 // pred_check
        %p226 = pneg %p225
      $region30: #{tpu_custom_call.1} parent=5 // pred_check_branch
        %228 = sbr.rel (%p226) target = $region32
      $region31: #{tpu_custom_call.1} parent=5 // pred_region
        // Predicated region
        $region33: #{tpu_custom_call.1} parent=31 // pred_check
          %p229 = pneg %p56
        $region34: #{tpu_custom_call.1} parent=31 // pred_check_branch
          %231 = sbr.rel (%p229) target = $region36
        $region35: #{tpu_custom_call.1} parent=31 // pred_region
          %s232 = sand.u32 %s46, 1
          %s233 = scalar_lea.sflag [#allocation5], %s232
          %s234 = sand.u32 %s46, 1
          %s235 = smul.addr %s234, 256
          %s236 = scalar_lea.vmem [#allocation4], %s235
          %s237 = smul.u32 32, %s30
          %s239 = ssub.s32 4096, 4096
          %240 = vsyncadd %s233, %s239
          %s241 = smul.addr %s29, 32
          %s242 = sadd.s32 %s237, %s241
          %s243 = smul.addr %s242, 128
          %s244 = scalar_lea.hbm %s0, %s243
          %s245 = sshll.u32 %s236, 4
          %s246 = int_to_ptr.vmem [resolvable:$true] %s245
          %251 = dma.hbm_to_vmem [thread:$0]  %s244, 4096, %s246, %s233, 128, 128, 8
        $region36: #{tpu_custom_call.1} parent=31 // pred_fallthru
          _
      $region32: #{tpu_custom_call.1} parent=5 // pred_fallthru
        _
      %p252 = scmp.le.s32.totalorder 1, %s22
      %p253 = scmp.lt.s32.totalorder %s22, 3
      %p254 = pnand %p252, %p253
      %p255 = pneg %p254
      // Predicated region
      $region37: #{tpu_custom_call.1} parent=5 // pred_check
        _
      $region38: #{tpu_custom_call.1} parent=5 // pred_check_branch
        %257 = sbr.rel (%p254) target = $region40
      $region39: #{tpu_custom_call.1} parent=5 // pred_region
        %s258 = ssub.s32 %s22, 1
        %s259 = sand.u32 %s49, 1
        %s260 = scalar_lea.sflag [#allocation5], %s259
        %s261 = sand.u32 %s49, 1
        %s262 = smul.addr %s261, 256
        %s263 = scalar_lea.vmem [#allocation4], %s262
        // Predicated region
        $region41: #{tpu_custom_call.1} parent=39 // pred_check
          %p264 = pneg %p62
        $region42: #{tpu_custom_call.1} parent=39 // pred_check_branch
          %266 = sbr.rel (%p264) target = $region44
        $region43: #{tpu_custom_call.1} parent=39 // pred_region
          %267 = dma.done %s260, 4096
        $region44: #{tpu_custom_call.1} parent=39 // pred_fallthru
          _
        %s268 = sand.u32 %s49, 1
        %s269 = scalar_lea.sflag [#allocation5], %s268
        %s270 = sand.u32 %s49, 1
        %s271 = smul.addr %s270, 256
        %s272 = scalar_lea.vmem [#allocation4], %s271
        %p273 = pneg %p62
        %p274 = pneg %p59
        %p275 = pneg %p83
        %p276 = pneg %p80
        %p277 = pneg %p104
        %p278 = pneg %p101
        %p279 = pneg %p125
        %p280 = pneg %p122
        %p281 = pneg %p146
        %p282 = pneg %p143
        %p283 = pneg %p172
        %p284 = pneg %p169
        %s285 = sand.u32 %s159, 1
        %s286 = scalar_lea.sflag [#allocation6], %s285
        %s287 = sand.u32 %s159, 1
        %s288 = scalar_lea.vmem [#allocation7], %s287
        %p289 = pneg %p198
        %p290 = pneg %p195
        %s291 = sand.u32 %s185, 1
        %s292 = scalar_lea.sflag [#allocation9], %s291
        %s293 = sand.u32 %s185, 1
        %s294 = scalar_lea.vmem [#allocation8], %s293
        %s295 = smul.u32 32, %s32
        %p296 = scmp.eq.s32.totalorder %s32, 0
        // Predicated region
        $region45: #{tpu_custom_call.1} parent=39 // pred_check
          %p297 = pneg %p296
        $region46: #{tpu_custom_call.1} parent=39 // pred_check_branch
          %299 = sbr.rel (%p297) target = $region48
        $region47: #{tpu_custom_call.1} parent=39 // pred_region
          %300 = vst [vmem:[#allocation2] sm:$0x1] 0.0
          %301 = vst [vmem:[#allocation3] sm:$0x1] 0.0
        $region48: #{tpu_custom_call.1} parent=39 // pred_fallthru
          _
        %v302 = vld [vmem:[%s263] sm:$0xff]
        %v303 = vld [vmem:[%s263 + $0x8] sm:$0xff]
        %v304 = vld [vmem:[%s263 + $0x10] sm:$0xff]
        %v305 = vld [vmem:[%s263 + $0x18] sm:$0xff]
        %v306 = vld [vmem:[%s263 + $0x20] sm:$0xff]
        %v307 = vld [vmem:[%s263 + $0x28] sm:$0xff]
        %v308 = vld [vmem:[%s263 + $0x30] sm:$0xff]
        %v309 = vld [vmem:[%s263 + $0x38] sm:$0xff]
        %v310 = vld [vmem:[%s263 + $0x40] sm:$0xff]
        %v311 = vld [vmem:[%s263 + $0x48] sm:$0xff]
        %v312 = vld [vmem:[%s263 + $0x50] sm:$0xff]
        %v313 = vld [vmem:[%s263 + $0x58] sm:$0xff]
        %v314 = vld [vmem:[%s263 + $0x60] sm:$0xff]
        %v315 = vld [vmem:[%s263 + $0x68] sm:$0xff]
        %v316 = vld [vmem:[%s263 + $0x70] sm:$0xff]
        %v317 = vld [vmem:[%s263 + $0x78] sm:$0xff]
        %v318 = vld [vmem:[%s263 + $0x80] sm:$0xff]
        %v319 = vld [vmem:[%s263 + $0x88] sm:$0xff]
        %v320 = vld [vmem:[%s263 + $0x90] sm:$0xff]
        %v321 = vld [vmem:[%s263 + $0x98] sm:$0xff]
        %v322 = vld [vmem:[%s263 + $0xa0] sm:$0xff]
        %v323 = vld [vmem:[%s263 + $0xa8] sm:$0xff]
        %v324 = vld [vmem:[%s263 + $0xb0] sm:$0xff]
        %v325 = vld [vmem:[%s263 + $0xb8] sm:$0xff]
        %v326 = vld [vmem:[%s263 + $0xc0] sm:$0xff]
        %v327 = vld [vmem:[%s263 + $0xc8] sm:$0xff]
        %v328 = vld [vmem:[%s263 + $0xd0] sm:$0xff]
        %v329 = vld [vmem:[%s263 + $0xd8] sm:$0xff]
        %v330 = vld [vmem:[%s263 + $0xe0] sm:$0xff]
        %v331 = vld [vmem:[%s263 + $0xe8] sm:$0xff]
        %v332 = vld [vmem:[%s263 + $0xf0] sm:$0xff]
        %v333 = vld [vmem:[%s263 + $0xf8] sm:$0xff]
        %v334 = vld [vmem:[#allocation2] sm:$0x1]
        %v335 = vadd.f32 %v302, %v303
        %v336 = vadd.f32 %v335, %v304
        %v337 = vadd.f32 %v336, %v305
        %v338 = vadd.f32 %v337, %v306
        %v339 = vadd.f32 %v338, %v307
        %v340 = vadd.f32 %v339, %v308
        %v341 = vadd.f32 %v340, %v309
        %v342 = vadd.f32 %v341, %v310
        %v343 = vadd.f32 %v342, %v311
        %v344 = vadd.f32 %v343, %v312
        %v345 = vadd.f32 %v344, %v313
        %v346 = vadd.f32 %v345, %v314
        %v347 = vadd.f32 %v346, %v315
        %v348 = vadd.f32 %v347, %v316
        %v349 = vadd.f32 %v348, %v317
        %v350 = vadd.f32 %v349, %v318
        %v351 = vadd.f32 %v350, %v319
        %v352 = vadd.f32 %v351, %v320
        %v353 = vadd.f32 %v352, %v321
        %v354 = vadd.f32 %v353, %v322
        %v355 = vadd.f32 %v354, %v323
        %v356 = vadd.f32 %v355, %v324
        %v357 = vadd.f32 %v356, %v325
        %v358 = vadd.f32 %v357, %v326
        %v359 = vadd.f32 %v358, %v327
        %v360 = vadd.f32 %v359, %v328
        %v361 = vadd.f32 %v360, %v329
        %v362 = vadd.f32 %v361, %v330
        %v363 = vadd.f32 %v362, %v331
        %v364 = vadd.f32 %v363, %v332
        %v365 = vadd.f32 %v364, %v333
        %v366 = vrot.slane %v365, 4
        %v367 = vadd.f32 %v365, %v366
        %v368 = vrot.slane %v367, 2
        %v369 = vadd.f32 %v367, %v368
        %v370 = vrot.slane %v369, 1
        %v371 = vadd.f32 %v369, %v370
        %v372 = vadd.f32 %v334, %v371
        %373 = vst [vmem:[#allocation2] sm:$0x1] %v372
        %v374 = vld [vmem:[#allocation3] sm:$0x1]
        %v375 = vmul.f32 %v302, %v302
        %v376 = vmul.f32 %v303, %v303
        %v377 = vmul.f32 %v304, %v304
        %v378 = vmul.f32 %v305, %v305
        %v379 = vmul.f32 %v306, %v306
        %v380 = vmul.f32 %v307, %v307
        %v381 = vmul.f32 %v308, %v308
        %v382 = vmul.f32 %v309, %v309
        %v383 = vmul.f32 %v310, %v310
        %v384 = vmul.f32 %v311, %v311
        %v385 = vmul.f32 %v312, %v312
        %v386 = vmul.f32 %v313, %v313
        %v387 = vmul.f32 %v314, %v314
        %v388 = vmul.f32 %v315, %v315
        %v389 = vmul.f32 %v316, %v316
        %v390 = vmul.f32 %v317, %v317
        %v391 = vmul.f32 %v318, %v318
        %v392 = vmul.f32 %v319, %v319
        %v393 = vmul.f32 %v320, %v320
        %v394 = vmul.f32 %v321, %v321
        %v395 = vmul.f32 %v322, %v322
        %v396 = vmul.f32 %v323, %v323
        %v397 = vmul.f32 %v324, %v324
        %v398 = vmul.f32 %v325, %v325
        %v399 = vmul.f32 %v326, %v326
        %v400 = vmul.f32 %v327, %v327
        %v401 = vmul.f32 %v328, %v328
        %v402 = vmul.f32 %v329, %v329
        %v403 = vmul.f32 %v330, %v330
        %v404 = vmul.f32 %v331, %v331
        %v405 = vmul.f32 %v332, %v332
        %v406 = vmul.f32 %v333, %v333
        %v407 = vadd.f32 %v375, %v376
        %v408 = vadd.f32 %v407, %v377
        %v409 = vadd.f32 %v408, %v378
        %v410 = vadd.f32 %v409, %v379
        %v411 = vadd.f32 %v410, %v380
        %v412 = vadd.f32 %v411, %v381
        %v413 = vadd.f32 %v412, %v382
        %v414 = vadd.f32 %v413, %v383
        %v415 = vadd.f32 %v414, %v384
        %v416 = vadd.f32 %v415, %v385
        %v417 = vadd.f32 %v416, %v386
        %v418 = vadd.f32 %v417, %v387
        %v419 = vadd.f32 %v418, %v388
        %v420 = vadd.f32 %v419, %v389
        %v421 = vadd.f32 %v420, %v390
        %v422 = vadd.f32 %v421, %v391
        %v423 = vadd.f32 %v422, %v392
        %v424 = vadd.f32 %v423, %v393
        %v425 = vadd.f32 %v424, %v394
        %v426 = vadd.f32 %v425, %v395
        %v427 = vadd.f32 %v426, %v396
        %v428 = vadd.f32 %v427, %v397
        %v429 = vadd.f32 %v428, %v398
        %v430 = vadd.f32 %v429, %v399
        %v431 = vadd.f32 %v430, %v400
        %v432 = vadd.f32 %v431, %v401
        %v433 = vadd.f32 %v432, %v402
        %v434 = vadd.f32 %v433, %v403
        %v435 = vadd.f32 %v434, %v404
        %v436 = vadd.f32 %v435, %v405
        %v437 = vadd.f32 %v436, %v406
        %v438 = vrot.slane %v437, 4
        %v439 = vadd.f32 %v437, %v438
        %v440 = vrot.slane %v439, 2
        %v441 = vadd.f32 %v439, %v440
        %v442 = vrot.slane %v441, 1
        %v443 = vadd.f32 %v441, %v442
        %v444 = vadd.f32 %v374, %v443
        %445 = vst [vmem:[#allocation3] sm:$0x1] %v444
        // Predicated region
        $region49: #{tpu_custom_call.1} parent=39 // pred_check
          %p446 = pneg %p296
        $region50: #{tpu_custom_call.1} parent=39 // pred_check_branch
          %448 = sbr.rel (%p446) target = $region52
        $region51: #{tpu_custom_call.1} parent=39 // pred_region
          %v449 = vld [vmem:[%s3] sm:$0xff]
          %v450 = vld [vmem:[%s3 + $0x8] sm:$0xff]
          %v451 = vld [vmem:[%s3 + $0x10] sm:$0xff]
          %v452 = vld [vmem:[%s3 + $0x18] sm:$0xff]
          %v453 = vld [vmem:[%s3 + $0x20] sm:$0xff]
          %v454 = vld [vmem:[%s3 + $0x28] sm:$0xff]
          %v455 = vld [vmem:[%s3 + $0x30] sm:$0xff]
          %v456 = vld [vmem:[%s3 + $0x38] sm:$0xff]
          %v457 = vld [vmem:[%s3 + $0x40] sm:$0xff]
          %v458 = vld [vmem:[%s3 + $0x48] sm:$0xff]
          %v459 = vld [vmem:[%s3 + $0x50] sm:$0xff]
          %v460 = vld [vmem:[%s3 + $0x58] sm:$0xff]
          %v461 = vld [vmem:[%s3 + $0x60] sm:$0xff]
          %v462 = vld [vmem:[%s3 + $0x68] sm:$0xff]
          %v463 = vld [vmem:[%s3 + $0x70] sm:$0xff]
          %v464 = vld [vmem:[%s3 + $0x78] sm:$0xff]
          %v465 = vld [vmem:[%s4] sm:$0xff]
          %v466 = vld [vmem:[%s4 + $0x8] sm:$0xff]
          %v467 = vld [vmem:[%s4 + $0x10] sm:$0xff]
          %v468 = vld [vmem:[%s4 + $0x18] sm:$0xff]
          %v469 = vld [vmem:[#allocation2] sm:$0x1]
          %470 = vmatprep.subr.mxu0 0.0
          %471 = vmatpush1.msra.mxu0 %v464
          %472 = vmatprep.subr.mxu0 0.0
          %473 = vmatpush1.msra.mxu0 %v463
          %474 = vmatprep.subr.mxu0 0.0
          %475 = vmatpush1.msra.mxu0 %v462
          %476 = vmatprep.subr.mxu0 0.0
          %477 = vmatpush1.msra.mxu0 %v461
          %478 = vmatprep.subr.mxu0 0.0
          %479 = vmatpush1.msra.mxu0 %v460
          %480 = vmatprep.subr.mxu0 0.0
          %481 = vmatpush1.msra.mxu0 %v459
          %482 = vmatprep.subr.mxu0 0.0
          %483 = vmatpush1.msra.mxu0 %v458
          %484 = vmatprep.subr.mxu0 0.0
          %485 = vmatpush1.msra.mxu0 %v457
          %486 = vmatprep.subr.mxu0 0.0
          %487 = vmatpush1.msra.mxu0 %v456
          %488 = vmatprep.subr.mxu0 0.0
          %489 = vmatpush1.msra.mxu0 %v455
          %490 = vmatprep.subr.mxu0 0.0
          %491 = vmatpush1.msra.mxu0 %v454
          %492 = vmatprep.subr.mxu0 0.0
          %493 = vmatpush1.msra.mxu0 %v453
          %494 = vmatprep.subr.mxu0 0.0
          %495 = vmatpush1.msra.mxu0 %v452
          %496 = vmatprep.subr.mxu0 0.0
          %497 = vmatpush1.msra.mxu0 %v451
          %498 = vmatprep.subr.mxu0 0.0
          %499 = vmatpush1.msra.mxu0 %v450
          %500 = vmatprep.subr.mxu0 0.0
          %501 = vmatpush1.msra.mxu0 %v449
          %502 = vmatprep.subr.mxu0 0.0
          %503 = vmatpush2.msra.mxu0 0.0
          %504 = vmatprep.subr.mxu0 0.0
          %505 = vmatpush2.msra.mxu0 0.0
          %506 = vmatprep.subr.mxu0 0.0
          %507 = vmatpush2.msra.mxu0 0.0
          %508 = vmatprep.subr.mxu0 0.0
          %509 = vmatpush2.msra.mxu0 0.0
          %510 = vmatprep.subr.mxu0 0.0
          %511 = vmatpush2.msra.mxu0 0.0
          %512 = vmatprep.subr.mxu0 0.0
          %513 = vmatpush2.msra.mxu0 0.0
          %514 = vmatprep.subr.mxu0 0.0
          %515 = vmatpush2.msra.mxu0 0.0
          %516 = vmatprep.subr.mxu0 0.0
          %517 = vmatpush2.msra.mxu0 0.0
          %518 = vmatprep.subr.mxu0 0.0
          %519 = vmatpush2.msra.mxu0 0.0
          %520 = vmatprep.subr.mxu0 0.0
          %521 = vmatpush2.msra.mxu0 0.0
          %522 = vmatprep.subr.mxu0 0.0
          %523 = vmatpush2.msra.mxu0 0.0
          %524 = vmatprep.subr.mxu0 0.0
          %525 = vmatpush2.msra.mxu0 0.0
          %526 = vmatprep.subr.mxu0 0.0
          %527 = vmatpush2.msra.mxu0 0.0
          %528 = vmatprep.subr.mxu0 0.0
          %529 = vmatpush2.msra.mxu0 0.0
          %530 = vmatprep.subr.mxu0 0.0
          %531 = vmatpush2.msra.mxu0 0.0
          %532 = vmatprep.subr.mxu0 0.0
          %533 = vmatpush2.msra.mxu0 0.0
          %534 = vmatprep.mubr.f32.mxu0 0.0
          %535 = vmatmul.mubr.f32.gmra.mxu0 %v469
          %v536 = vpop.f32.mrf.mxu0
          %v537 = vadd.f32 0.0, %v536
          %v538 = vpop.f32.mrf.mxu0
          %539 = vdwg.mxu0
          %v540 = vrcp.pop 1024.0
          %v541 = vmul.f32 %v537, %v540
          %vm542 = vcmask 261120
          %v544 = vsel %vm542, %v541, 0
          %546 = vmatprep.subr.mxu0 0.0
          %547 = vmatpush1.msra.mxu0 0.0
          %548 = vmatprep.subr.mxu0 0.0
          %549 = vmatpush1.msra.mxu0 0.0
          %550 = vmatprep.subr.mxu0 0.0
          %551 = vmatpush1.msra.mxu0 0.0
          %552 = vmatprep.subr.mxu0 0.0
          %553 = vmatpush1.msra.mxu0 0.0
          %554 = vmatprep.subr.mxu0 0.0
          %555 = vmatpush1.msra.mxu0 0.0
          %556 = vmatprep.subr.mxu0 0.0
          %557 = vmatpush1.msra.mxu0 0.0
          %558 = vmatprep.subr.mxu0 0.0
          %559 = vmatpush1.msra.mxu0 0.0
          %560 = vmatprep.subr.mxu0 0.0
          %561 = vmatpush1.msra.mxu0 0.0
          %562 = vmatprep.subr.mxu0 0.0
          %563 = vmatpush1.msra.mxu0 0.0
          %564 = vmatprep.subr.mxu0 0.0
          %565 = vmatpush1.msra.mxu0 0.0
          %566 = vmatprep.subr.mxu0 0.0
          %567 = vmatpush1.msra.mxu0 0.0
          %568 = vmatprep.subr.mxu0 0.0
          %569 = vmatpush1.msra.mxu0 0.0
          %570 = vmatprep.subr.mxu0 0.0
          %571 = vmatpush1.msra.mxu0 %v468
          %572 = vmatprep.subr.mxu0 0.0
          %573 = vmatpush1.msra.mxu0 %v467
          %574 = vmatprep.subr.mxu0 0.0
          %575 = vmatpush1.msra.mxu0 %v466
          %576 = vmatprep.subr.mxu0 0.0
          %577 = vmatpush1.msra.mxu0 %v465
          %578 = vmatprep.subr.mxu0 0.0
          %579 = vmatpush2.msra.mxu0 0.0
          %580 = vmatprep.subr.mxu0 0.0
          %581 = vmatpush2.msra.mxu0 0.0
          %582 = vmatprep.subr.mxu0 0.0
          %583 = vmatpush2.msra.mxu0 0.0
          %584 = vmatprep.subr.mxu0 0.0
          %585 = vmatpush2.msra.mxu0 0.0
          %586 = vmatprep.subr.mxu0 0.0
          %587 = vmatpush2.msra.mxu0 0.0
          %588 = vmatprep.subr.mxu0 0.0
          %589 = vmatpush2.msra.mxu0 0.0
          %590 = vmatprep.subr.mxu0 0.0
          %591 = vmatpush2.msra.mxu0 0.0
          %592 = vmatprep.subr.mxu0 0.0
          %593 = vmatpush2.msra.mxu0 0.0
          %594 = vmatprep.subr.mxu0 0.0
          %595 = vmatpush2.msra.mxu0 0.0
          %596 = vmatprep.subr.mxu0 0.0
          %597 = vmatpush2.msra.mxu0 0.0
          %598 = vmatprep.subr.mxu0 0.0
          %599 = vmatpush2.msra.mxu0 0.0
          %600 = vmatprep.subr.mxu0 0.0
          %601 = vmatpush2.msra.mxu0 0.0
          %602 = vmatprep.subr.mxu0 0.0
          %603 = vmatpush2.msra.mxu0 0.0
          %604 = vmatprep.subr.mxu0 0.0
          %605 = vmatpush2.msra.mxu0 0.0
          %606 = vmatprep.subr.mxu0 0.0
          %607 = vmatpush2.msra.mxu0 0.0
          %608 = vmatprep.subr.mxu0 0.0
          %609 = vmatpush2.msra.mxu0 0.0
          %610 = vmatprep.mubr.f32.mxu0 0.0
          %611 = vmatmul.mubr.f32.gmra.mxu0 %v544
          %v612 = vpop.f32.mrf.mxu0
          %v613 = vadd.f32 0.0, %v612
          %v614 = vpop.f32.mrf.mxu0
          %615 = vdwg.mxu0
          %v616 = vld [vmem:[#allocation3] sm:$0x1]
          %617 = vmatprep.subr.mxu0 0.0
          %618 = vmatpush1.msra.mxu0 %v464
          %619 = vmatprep.subr.mxu0 0.0
          %620 = vmatpush1.msra.mxu0 %v463
          %621 = vmatprep.subr.mxu0 0.0
          %622 = vmatpush1.msra.mxu0 %v462
          %623 = vmatprep.subr.mxu0 0.0
          %624 = vmatpush1.msra.mxu0 %v461
          %625 = vmatprep.subr.mxu0 0.0
          %626 = vmatpush1.msra.mxu0 %v460
          %627 = vmatprep.subr.mxu0 0.0
          %628 = vmatpush1.msra.mxu0 %v459
          %629 = vmatprep.subr.mxu0 0.0
          %630 = vmatpush1.msra.mxu0 %v458
          %631 = vmatprep.subr.mxu0 0.0
          %632 = vmatpush1.msra.mxu0 %v457
          %633 = vmatprep.subr.mxu0 0.0
          %634 = vmatpush1.msra.mxu0 %v456
          %635 = vmatprep.subr.mxu0 0.0
          %636 = vmatpush1.msra.mxu0 %v455
          %637 = vmatprep.subr.mxu0 0.0
          %638 = vmatpush1.msra.mxu0 %v454
          %639 = vmatprep.subr.mxu0 0.0
          %640 = vmatpush1.msra.mxu0 %v453
          %641 = vmatprep.subr.mxu0 0.0
          %642 = vmatpush1.msra.mxu0 %v452
          %643 = vmatprep.subr.mxu0 0.0
          %644 = vmatpush1.msra.mxu0 %v451
          %645 = vmatprep.subr.mxu0 0.0
          %646 = vmatpush1.msra.mxu0 %v450
          %647 = vmatprep.subr.mxu0 0.0
          %648 = vmatpush1.msra.mxu0 %v449
          %649 = vmatprep.subr.mxu0 0.0
          %650 = vmatpush2.msra.mxu0 0.0
          %651 = vmatprep.subr.mxu0 0.0
          %652 = vmatpush2.msra.mxu0 0.0
          %653 = vmatprep.subr.mxu0 0.0
          %654 = vmatpush2.msra.mxu0 0.0
          %655 = vmatprep.subr.mxu0 0.0
          %656 = vmatpush2.msra.mxu0 0.0
          %657 = vmatprep.subr.mxu0 0.0
          %658 = vmatpush2.msra.mxu0 0.0
          %659 = vmatprep.subr.mxu0 0.0
          %660 = vmatpush2.msra.mxu0 0.0
          %661 = vmatprep.subr.mxu0 0.0
          %662 = vmatpush2.msra.mxu0 0.0
          %663 = vmatprep.subr.mxu0 0.0
          %664 = vmatpush2.msra.mxu0 0.0
          %665 = vmatprep.subr.mxu0 0.0
          %666 = vmatpush2.msra.mxu0 0.0
          %667 = vmatprep.subr.mxu0 0.0
          %668 = vmatpush2.msra.mxu0 0.0
          %669 = vmatprep.subr.mxu0 0.0
          %670 = vmatpush2.msra.mxu0 0.0
          %671 = vmatprep.subr.mxu0 0.0
          %672 = vmatpush2.msra.mxu0 0.0
          %673 = vmatprep.subr.mxu0 0.0
          %674 = vmatpush2.msra.mxu0 0.0
          %675 = vmatprep.subr.mxu0 0.0
          %676 = vmatpush2.msra.mxu0 0.0
          %677 = vmatprep.subr.mxu0 0.0
          %678 = vmatpush2.msra.mxu0 0.0
          %679 = vmatprep.subr.mxu0 0.0
          %680 = vmatpush2.msra.mxu0 0.0
          %681 = vmatprep.mubr.f32.mxu0 0.0
          %682 = vmatmul.mubr.f32.gmra.mxu0 %v616
          %v683 = vpop.f32.mrf.mxu0
          %v684 = vadd.f32 0.0, %v683
          %v685 = vpop.f32.mrf.mxu0
          %686 = vdwg.mxu0
          %v687 = vmul.f32 %v684, %v540
          %v689 = vsel %vm542, %v687, 0
          %691 = vmatprep.subr.mxu0 0.0
          %692 = vmatpush1.msra.mxu0 0.0
          %693 = vmatprep.subr.mxu0 0.0
          %694 = vmatpush1.msra.mxu0 0.0
          %695 = vmatprep.subr.mxu0 0.0
          %696 = vmatpush1.msra.mxu0 0.0
          %697 = vmatprep.subr.mxu0 0.0
          %698 = vmatpush1.msra.mxu0 0.0
          %699 = vmatprep.subr.mxu0 0.0
          %700 = vmatpush1.msra.mxu0 0.0
          %701 = vmatprep.subr.mxu0 0.0
          %702 = vmatpush1.msra.mxu0 0.0
          %703 = vmatprep.subr.mxu0 0.0
          %704 = vmatpush1.msra.mxu0 0.0
          %705 = vmatprep.subr.mxu0 0.0
          %706 = vmatpush1.msra.mxu0 0.0
          %707 = vmatprep.subr.mxu0 0.0
          %708 = vmatpush1.msra.mxu0 0.0
          %709 = vmatprep.subr.mxu0 0.0
          %710 = vmatpush1.msra.mxu0 0.0
          %711 = vmatprep.subr.mxu0 0.0
          %712 = vmatpush1.msra.mxu0 0.0
          %713 = vmatprep.subr.mxu0 0.0
          %714 = vmatpush1.msra.mxu0 0.0
          %715 = vmatprep.subr.mxu0 0.0
          %716 = vmatpush1.msra.mxu0 %v468
          %717 = vmatprep.subr.mxu0 0.0
          %718 = vmatpush1.msra.mxu0 %v467
          %719 = vmatprep.subr.mxu0 0.0
          %720 = vmatpush1.msra.mxu0 %v466
          %721 = vmatprep.subr.mxu0 0.0
          %722 = vmatpush1.msra.mxu0 %v465
          %723 = vmatprep.subr.mxu0 0.0
          %724 = vmatpush2.msra.mxu0 0.0
          %725 = vmatprep.subr.mxu0 0.0
          %726 = vmatpush2.msra.mxu0 0.0
          %727 = vmatprep.subr.mxu0 0.0
          %728 = vmatpush2.msra.mxu0 0.0
          %729 = vmatprep.subr.mxu0 0.0
          %730 = vmatpush2.msra.mxu0 0.0
          %731 = vmatprep.subr.mxu0 0.0
          %732 = vmatpush2.msra.mxu0 0.0
          %733 = vmatprep.subr.mxu0 0.0
          %734 = vmatpush2.msra.mxu0 0.0
          %735 = vmatprep.subr.mxu0 0.0
          %736 = vmatpush2.msra.mxu0 0.0
          %737 = vmatprep.subr.mxu0 0.0
          %738 = vmatpush2.msra.mxu0 0.0
          %739 = vmatprep.subr.mxu0 0.0
          %740 = vmatpush2.msra.mxu0 0.0
          %741 = vmatprep.subr.mxu0 0.0
          %742 = vmatpush2.msra.mxu0 0.0
          %743 = vmatprep.subr.mxu0 0.0
          %744 = vmatpush2.msra.mxu0 0.0
          %745 = vmatprep.subr.mxu0 0.0
          %746 = vmatpush2.msra.mxu0 0.0
          %747 = vmatprep.subr.mxu0 0.0
          %748 = vmatpush2.msra.mxu0 0.0
          %749 = vmatprep.subr.mxu0 0.0
          %750 = vmatpush2.msra.mxu0 0.0
          %751 = vmatprep.subr.mxu0 0.0
          %752 = vmatpush2.msra.mxu0 0.0
          %753 = vmatprep.subr.mxu0 0.0
          %754 = vmatpush2.msra.mxu0 0.0
          %755 = vmatprep.mubr.f32.mxu0 0.0
          %756 = vmatmul.mubr.f32.gmra.mxu0 %v689
          %v757 = vpop.f32.mrf.mxu0
          %v758 = vadd.f32 0.0, %v757
          %v759 = vpop.f32.mrf.mxu0
          %760 = vdwg.mxu0
          %v761 = vmul.f32 %v613, %v613
          %v762 = vsub.f32 %v758, %v761
          %v763 = vmax.f32 %v762, 0.0
          %v764 = vadd.f32 %v763, 1e-06
          %v765 = vrsqrt.pop %v764
          %v766 = vld [vmem:[%s1] sm:$0x1]
          %v767 = vmul.f32 %v765, %v766
          %768 = vst [vmem:[%s288] sm:$0x1] %v767
          %v769 = vld [vmem:[%s2] sm:$0x1]
          %v770 = vmul.f32 %v613, %v767
          %v771 = vsub.f32 %v769, %v770
          %772 = vst [vmem:[%s294] sm:$0x1] %v771
        $region52: #{tpu_custom_call.1} parent=39 // pred_fallthru
          _
        %s773 = sand.u32 %s159, 1
        %s774 = scalar_lea.sflag [#allocation6], %s773
        %s775 = sand.u32 %s159, 1
        %s776 = scalar_lea.vmem [#allocation7], %s775
        %s777 = sand.u32 %s185, 1
        %s778 = scalar_lea.sflag [#allocation9], %s777
        %s779 = sand.u32 %s185, 1
        %s780 = scalar_lea.vmem [#allocation8], %s779
        // Predicated region
        $region53: #{tpu_custom_call.1} parent=39 // pred_check
          %p781 = pneg %p169
        $region54: #{tpu_custom_call.1} parent=39 // pred_check_branch
          %783 = sbr.rel (%p781) target = $region56
        $region55: #{tpu_custom_call.1} parent=39 // pred_region
          %s785 = ssub.s32 16, 16
          %786 = vsyncadd %s774, %s785
          %s787 = smul.addr %s31, 16
          %s788 = scalar_lea.hbm %s5, %s787
          %s790 = sshll.u32 %s776, 4
          %s791 = int_to_ptr.vmem [resolvable:$true] %s790
          %793 = dma.vmem_to_hbm [thread:$0]  %s791, 16, %s788, %s774
        $region56: #{tpu_custom_call.1} parent=39 // pred_fallthru
          _
        // Predicated region
        $region57: #{tpu_custom_call.1} parent=39 // pred_check
          %p794 = pneg %p195
        $region58: #{tpu_custom_call.1} parent=39 // pred_check_branch
          %796 = sbr.rel (%p794) target = $region60
        $region59: #{tpu_custom_call.1} parent=39 // pred_region
          %s798 = ssub.s32 16, 16
          %799 = vsyncadd %s778, %s798
          %s800 = smul.addr %s31, 16
          %s801 = scalar_lea.hbm %s6, %s800
          %s803 = sshll.u32 %s780, 4
          %s804 = int_to_ptr.vmem [resolvable:$true] %s803
          %806 = dma.vmem_to_hbm [thread:$0]  %s804, 16, %s801, %s778
        $region60: #{tpu_custom_call.1} parent=39 // pred_fallthru
          _
      $region40: #{tpu_custom_call.1} parent=5 // pred_fallthru
        _
      %p807 = scmp.le.s32.totalorder 2, %s22
      // Predicated region
      $region61: #{tpu_custom_call.1} parent=5 // pred_check
        %p808 = pneg %p807
      $region62: #{tpu_custom_call.1} parent=5 // pred_check_branch
        %810 = sbr.rel (%p808) target = $region64
      $region63: #{tpu_custom_call.1} parent=5 // pred_region
        %s811 = ssub.s32 %s22, 2
        // Predicated region
        $region65: #{tpu_custom_call.1} parent=63 // pred_check
          %p812 = pneg %p175
        $region66: #{tpu_custom_call.1} parent=63 // pred_check_branch
          %814 = sbr.rel (%p812) target = $region68
        $region67: #{tpu_custom_call.1} parent=63 // pred_region
          %s815 = sand.u32 %s160, 1
          %s816 = scalar_lea.sflag [#allocation6], %s815
          %s817 = sand.u32 %s160, 1
          %s818 = scalar_lea.vmem [#allocation7], %s817
          %819 = dma.done %s816, 16
        $region68: #{tpu_custom_call.1} parent=63 // pred_fallthru
          _
        // Predicated region
        $region69: #{tpu_custom_call.1} parent=63 // pred_check
          %p820 = pneg %p201
        $region70: #{tpu_custom_call.1} parent=63 // pred_check_branch
          %822 = sbr.rel (%p820) target = $region72
        $region71: #{tpu_custom_call.1} parent=63 // pred_region
          %s823 = sand.u32 %s186, 1
          %s824 = scalar_lea.sflag [#allocation9], %s823
          %s825 = sand.u32 %s186, 1
          %s826 = scalar_lea.vmem [#allocation8], %s825
          %827 = dma.done %s824, 16
        $region72: #{tpu_custom_call.1} parent=63 // pred_fallthru
          _
      $region64: #{tpu_custom_call.1} parent=5 // pred_fallthru
        _
    $region6: #{tpu_custom_call.1} parent=1 // loop_footer
      %s26 = sadd.s32 1, %s22
    $region7: #{tpu_custom_call.1} parent=1 // loop_footer_branch
      %21 = sbr.rel target = $region3
    $region8: #{tpu_custom_call.1} parent=1 // loop_exit
      _
    %828 = vsyncpa [#allocation5], 1
    %s829 = scalar_lea.sflag [#allocation5], 1
    %830 = vsyncpa %s829, 1
    %831 = vsyncpa [#allocation6], 1
    %s832 = scalar_lea.sflag [#allocation6], 1
    %833 = vsyncpa %s832, 1
    %834 = vsyncpa [#allocation9], 1
    %s835 = scalar_lea.sflag [#allocation9], 1
    %836 = vsyncpa %s835, 1

</llo_original>
